<compile_context>
chip_gen: v5e
topology: v5e:2x2
jax: 0.10.0
libtpu: 0.0.40
codegen_flags: <defaults>
</compile_context>

<pallas_src>
import functools

import jax
import jax.numpy as jnp
from jax.experimental import pallas as pl
from jax.experimental.pallas import tpu as pltpu

LANE = 128      # TPU lane width; weight blocks are zero-padded to this.
N_MATS = 5      # 3 shared layers + fused head-hidden + fused block-diag head-out.
BIAS_ROWS = 8   # one f32 bias row per matmul, padded to a (8, 128) block.
W_ROWS = N_MATS * LANE  # 640


def _round_up(n, m):
    return ((n + m - 1) // m) * m


# --------------------------------------------------------------------------
# Kernel: 5 matmuls (MXU, bf16 operands / f32 accumulation) + bias + ReLU.
#   x_ref:  (TB, Sp)   f32  unpadded states (Sp = round_up(state_size, 8))
#   w_ref:  (640, 128) bf16 packed weight slab (VMEM-resident across grid)
#   b_ref:  (8, 128)   f32  bias rows (VMEM-resident across grid)
#   o_ref:  (TB, OUT)  f32  lane 0 = V(s), lanes [1, 1+A) = A(s, .), rest 0
# --------------------------------------------------------------------------
def dueling_kernel(x_ref, w_ref, b_ref, o_ref):
    sp = x_ref.shape[1]

    # Layer 0: contract only over the Sp live rows of the first weight block
    # (no 128-lane input padding needed).
    h = jnp.dot(x_ref[...].astype(jnp.bfloat16), w_ref[0:sp, :],
                preferred_element_type=jnp.float32) + b_ref[0:1, :]
    h = jnp.maximum(h, 0.0)

    # Layers 1..3: shared(2 more) + fused head-hidden, all followed by ReLU.
    for li in range(1, N_MATS - 1):
        w = w_ref[li * LANE:(li + 1) * LANE, :]              # (128, 128) bf16
        h = jnp.dot(h.astype(jnp.bfloat16), w,
                    preferred_element_type=jnp.float32) + b_ref[li:li + 1, :]
        h = jnp.maximum(h, 0.0)

    # Layer 4: fused block-diagonal output layer -> [v | a | 0...], no ReLU.
    w_out = w_ref[(N_MATS - 1) * LANE:N_MATS * LANE, :]
    res = jnp.dot(h.astype(jnp.bfloat16), w_out,
                  preferred_element_type=jnp.float32) + b_ref[N_MATS - 1:N_MATS, :]

    # Narrow store: only the first OUT (=8) lanes carry live data.
    o_ref[...] = res[:, :o_ref.shape[1]]


# --------------------------------------------------------------------------
# Parameter packing: ONE bf16 weight slab + one f32 bias block, built ONCE.
# --------------------------------------------------------------------------
def pack_params(p, action_size):
    vh = p["wv1"].shape[1]
    ah = p["wa1"].shape[1]

    def pad_w(w):
        r, c = w.shape
        return jnp.pad(w.astype(jnp.float32), ((0, LANE - r), (0, LANE - c)))

    # Fused head-hidden: [Wv1 | Wa1]  -> (16, 32).
    wh1 = jnp.concatenate([p["wv1"], p["wa1"]], axis=1)
    # Fused block-diagonal head-output: rows [0:vh) -> col 0 (V),
    # rows [vh:vh+ah) -> cols [1:1+A) (advantages).
    wh2 = jnp.zeros((vh + ah, 1 + action_size), jnp.float32)
    wh2 = wh2.at[:vh, 0:1].set(p["wv2"])
    wh2 = wh2.at[vh:, 1:].set(p["wa2"])

    w_slab = jnp.concatenate(
        [pad_w(p["w1"]), pad_w(p["w2"]), pad_w(p["w3"]), pad_w(wh1), pad_w(wh2)],
        axis=0).astype(jnp.bfloat16)                                  # (640, 128)

    def pad_b(b):
        b = b.reshape(1, -1).astype(jnp.float32)
        return jnp.pad(b, ((0, 0), (0, LANE - b.shape[1])))

    bias = jnp.concatenate(
        [pad_b(p["b1"]), pad_b(p["b2"]), pad_b(p["b3"]),
         pad_b(jnp.concatenate([p["bv1"], p["ba1"]], axis=0)),
         pad_b(jnp.concatenate([p["bv2"], p["ba2"]], axis=0)),
         jnp.zeros((BIAS_ROWS - N_MATS, LANE), jnp.float32)], axis=0)  # (8, 128)

    return w_slab, bias


# --------------------------------------------------------------------------
# Wrapper: tile the batch, run the kernel, finalize the dueling combine.
# --------------------------------------------------------------------------
@functools.partial(jax.jit, static_argnames=("action_size",))
def dueling_forward(x, w_slab, bias, *, action_size):
    B, S = x.shape
    Sp = max(8, _round_up(S, 8))          # narrow input block (not 128 lanes)
    OUT = max(8, _round_up(1 + action_size, 8))
    assert Sp <= LANE and 1 + action_size <= LANE

    # Batch tile: large (per review) but guaranteeing >= 2 grid blocks for
    # moderate/large batches so v7x's two TensorCores both get work; capped
    # at 2048 so the working set fits v5e's 16 MiB default scoped VMEM.
    TB = min(2048, max(8, _round_up(pl.cdiv(B, 2), 8)))
    Bp = _round_up(B, TB)

    # x stays f32: after un-padding it is only Sp*4 = 32 B/row of traffic.
    x_pad = x.astype(jnp.float32)
    if Bp != B or Sp != S:
        x_pad = jnp.pad(x_pad, ((0, Bp - B), (0, Sp - S)))

    flops = 2 * Bp * (Sp + (N_MATS - 1) * LANE) * LANE
    cost = pl.CostEstimate(
        flops=flops,
        transcendentals=0,
        bytes_accessed=int(x_pad.size * 4 + w_slab.size * 2
                           + bias.size * 4 + Bp * OUT * 4),
    )

    va = pl.pallas_call(
        dueling_kernel,
        out_shape=jax.ShapeDtypeStruct((Bp, OUT), jnp.float32),
        grid_spec=pltpu.PrefetchScalarGridSpec(
            num_scalar_prefetch=0,
            grid=(Bp // TB,),
            in_specs=[
                pl.BlockSpec((TB, Sp), lambda i: (i, 0)),       # states (narrow)
                pl.BlockSpec((W_ROWS, LANE), lambda i: (0, 0)),  # weights (resident)
                pl.BlockSpec((BIAS_ROWS, LANE), lambda i: (0, 0)),  # bias (resident)
            ],
            out_specs=pl.BlockSpec((TB, OUT), lambda i: (i, 0)),
        ),
        compiler_params=pltpu.CompilerParams(
            dimension_semantics=("parallel",)),
        cost_estimate=cost,
    )(x_pad, w_slab, bias)

    v = va[:B, 0:1]                         # (B, 1)
    a = va[:B, 1:1 + action_size]           # (B, A)
    # Dueling combine. NOTE: the reference module uses a.mean() with no dim,
    # i.e. one global mean over the whole advantage tensor; it crosses batch
    # grid blocks, so it is applied here (only padded rows are excluded).
    return v + a - jnp.mean(a)


# --------------------------------------------------------------------------
# Init (matches nn.Linear default U(-1/sqrt(fan_in), 1/sqrt(fan_in))) + ref.
# TODO(synk): torch.manual_seed RNG stream is not reproduced; JAX PRNG is used.
# --------------------------------------------------------------------------
def init_params(key, state_size, action_size,
                shared_hidden=(32, 32, 16), value_head=(16,), advantage_head=(16,)):
    def linear(k, fan_in, fan_out):
        kw, kb = jax.random.split(k)
        bound = 1.0 / float(fan_in) ** 0.5
        w = jax.random.uniform(kw, (fan_in, fan_out), jnp.float32, -bound, bound)
        b = jax.random.uniform(kb, (fan_out,), jnp.float32, -bound, bound)
        return w, b

    keys = jax.random.split(key, 7)
    p = {}
    p["w1"], p["b1"] = linear(keys[0], state_size, shared_hidden[0])
    p["w2"], p["b2"] = linear(keys[1], shared_hidden[0], shared_hidden[1])
    p["w3"], p["b3"] = linear(keys[2], shared_hidden[1], shared_hidden[2])
    p["wv1"], p["bv1"] = linear(keys[3], shared_hidden[2], value_head[0])
    p["wv2"], p["bv2"] = linear(keys[4], value_head[0], 1)
    p["wa1"], p["ba1"] = linear(keys[5], shared_hidden[2], advantage_head[0])
    p["wa2"], p["ba2"] = linear(keys[6], advantage_head[0], action_size)
    return p


def reference_forward(x, p):
    h = jnp.maximum(x @ p["w1"] + p["b1"], 0.0)
    h = jnp.maximum(h @ p["w2"] + p["b2"], 0.0)
    h = jnp.maximum(h @ p["w3"] + p["b3"], 0.0)
    v = jnp.maximum(h @ p["wv1"] + p["bv1"], 0.0)
    v = v @ p["wv2"] + p["bv2"]                       # (B, 1)
    a = jnp.maximum(h @ p["wa1"] + p["ba1"], 0.0)
    a = a @ p["wa2"] + p["ba2"]                       # (B, A)
    return v + a - jnp.mean(a)                        # global mean, as in spec


if __name__ == "__main__":
    key = jax.random.PRNGKey(0)
    k_param, k_x = jax.random.split(key)

    batch = 64          # exercises the multi-block (grid=2) path
    state_size = 8
    action_size = 4

    params = init_params(k_param, state_size, action_size)
    x = jax.random.normal(k_x, (batch, state_size), jnp.float32)

    # Pack parameters ONCE (hoisted out of the per-call forward, per review).
    w_slab, bias = pack_params(params, action_size)

    q = dueling_forward(x, w_slab, bias, action_size=action_size)
    jax.block_until_ready(q)

    q_ref = reference_forward(x, params)
    assert q.shape == (batch, action_size)
    # Tolerance is looser than before because the matmul operands are bf16
    # (f32 accumulation), per the perf review; output/bias math stays f32.
    err = float(jnp.max(jnp.abs(q - q_ref)))
    assert jnp.allclose(q, q_ref, atol=5e-2, rtol=5e-2), err

    print("KERNEL_OK")
</pallas_src>

<mosaic_0001>
module attributes {stable_mosaic.version = 11 : i64} {
  func.func @dueling_kernel(%arg0: i32, %arg1: memref<32x8xf32, #tpu.memory_space<vmem>>, %arg2: memref<640x128xbf16, #tpu.memory_space<vmem>>, %arg3: memref<8x128xf32, #tpu.memory_space<vmem>>, %arg4: memref<32x8xf32, #tpu.memory_space<vmem>>) attributes {dimension_semantics = [#tpu.dimension_semantics<parallel>], iteration_bounds = array<i64: 2>, scalar_prefetch = 0 : i64, scratch_operands = 0 : i64, tpu.core_type = #tpu.core_type<tc>, window_params = [{transform_indices = @transform_0, window_bounds = array<i64: 32, 8>}, {pipeline_mode = #tpu.pipeline_mode<synchronous>, transform_indices = @transform_1, window_bounds = array<i64: 640, 128>}, {pipeline_mode = #tpu.pipeline_mode<synchronous>, transform_indices = @transform_2, window_bounds = array<i64: 8, 128>}, {transform_indices = @transform_3, window_bounds = array<i64: 32, 8>}]} {
    %c0 = arith.constant 0 : index
    %c0_0 = arith.constant 0 : index
    %0 = vector.load %arg1[%c0, %c0_0] : memref<32x8xf32, #tpu.memory_space<vmem>>, vector<32x8xf32>
    %1 = arith.truncf %0 : vector<32x8xf32> to vector<32x8xbf16>
    %c0_1 = arith.constant 0 : index
    %c0_2 = arith.constant 0 : index
    %2 = vector.load %arg2[%c0_1, %c0_2] : memref<640x128xbf16, #tpu.memory_space<vmem>>, vector<8x128xbf16>
    %cst = arith.constant dense<0.000000e+00> : vector<32x128xf32>
    %3 = tpu.matmul %1, %2, %cst {dimension_numbers = #tpu.dot_dimension_numbers<[1], [0], [0], [1], [0, 0, 1, 1], [], []>} : vector<32x8xbf16>, vector<8x128xbf16>, vector<32x128xf32> -> vector<32x128xf32>
    %c0_3 = arith.constant 0 : index
    %c0_4 = arith.constant 0 : index
    %4 = vector.load %arg3[%c0_3, %c0_4] : memref<8x128xf32, #tpu.memory_space<vmem>>, vector<1x128xf32>
    %5 = vector.broadcast %4 : vector<1x128xf32> to vector<32x128xf32>
    %6 = arith.addf %3, %5 : vector<32x128xf32>
    %cst_5 = arith.constant 0.000000e+00 : f32
    %7 = vector.broadcast %cst_5 : f32 to vector<32x128xf32>
    %8 = arith.maximumf %6, %7 : vector<32x128xf32>
    %c128 = arith.constant 128 : index
    %c0_6 = arith.constant 0 : index
    %9 = vector.load %arg2[%c128, %c0_6] : memref<640x128xbf16, #tpu.memory_space<vmem>>, vector<128x128xbf16>
    %10 = arith.truncf %8 : vector<32x128xf32> to vector<32x128xbf16>
    %cst_7 = arith.constant dense<0.000000e+00> : vector<32x128xf32>
    %11 = tpu.matmul %10, %9, %cst_7 {dimension_numbers = #tpu.dot_dimension_numbers<[1], [0], [0], [1], [0, 0, 1, 1], [], []>} : vector<32x128xbf16>, vector<128x128xbf16>, vector<32x128xf32> -> vector<32x128xf32>
    %c1 = arith.constant 1 : index
    %c0_8 = arith.constant 0 : index
    %12 = vector.load %arg3[%c1, %c0_8] : memref<8x128xf32, #tpu.memory_space<vmem>>, vector<1x128xf32>
    %13 = vector.broadcast %12 : vector<1x128xf32> to vector<32x128xf32>
    %14 = arith.addf %11, %13 : vector<32x128xf32>
    %cst_9 = arith.constant 0.000000e+00 : f32
    %15 = vector.broadcast %cst_9 : f32 to vector<32x128xf32>
    %16 = arith.maximumf %14, %15 : vector<32x128xf32>
    %c256 = arith.constant 256 : index
    %c0_10 = arith.constant 0 : index
    %17 = vector.load %arg2[%c256, %c0_10] : memref<640x128xbf16, #tpu.memory_space<vmem>>, vector<128x128xbf16>
    %18 = arith.truncf %16 : vector<32x128xf32> to vector<32x128xbf16>
    %cst_11 = arith.constant dense<0.000000e+00> : vector<32x128xf32>
    %19 = tpu.matmul %18, %17, %cst_11 {dimension_numbers = #tpu.dot_dimension_numbers<[1], [0], [0], [1], [0, 0, 1, 1], [], []>} : vector<32x128xbf16>, vector<128x128xbf16>, vector<32x128xf32> -> vector<32x128xf32>
    %c2 = arith.constant 2 : index
    %c0_12 = arith.constant 0 : index
    %20 = vector.load %arg3[%c2, %c0_12] : memref<8x128xf32, #tpu.memory_space<vmem>>, vector<1x128xf32>
    %21 = vector.broadcast %20 : vector<1x128xf32> to vector<32x128xf32>
    %22 = arith.addf %19, %21 : vector<32x128xf32>
    %cst_13 = arith.constant 0.000000e+00 : f32
    %23 = vector.broadcast %cst_13 : f32 to vector<32x128xf32>
    %24 = arith.maximumf %22, %23 : vector<32x128xf32>
    %c384 = arith.constant 384 : index
    %c0_14 = arith.constant 0 : index
    %25 = vector.load %arg2[%c384, %c0_14] : memref<640x128xbf16, #tpu.memory_space<vmem>>, vector<128x128xbf16>
    %26 = arith.truncf %24 : vector<32x128xf32> to vector<32x128xbf16>
    %cst_15 = arith.constant dense<0.000000e+00> : vector<32x128xf32>
    %27 = tpu.matmul %26, %25, %cst_15 {dimension_numbers = #tpu.dot_dimension_numbers<[1], [0], [0], [1], [0, 0, 1, 1], [], []>} : vector<32x128xbf16>, vector<128x128xbf16>, vector<32x128xf32> -> vector<32x128xf32>
    %c3 = arith.constant 3 : index
    %c0_16 = arith.constant 0 : index
    %28 = vector.load %arg3[%c3, %c0_16] : memref<8x128xf32, #tpu.memory_space<vmem>>, vector<1x128xf32>
    %29 = vector.broadcast %28 : vector<1x128xf32> to vector<32x128xf32>
    %30 = arith.addf %27, %29 : vector<32x128xf32>
    %cst_17 = arith.constant 0.000000e+00 : f32
    %31 = vector.broadcast %cst_17 : f32 to vector<32x128xf32>
    %32 = arith.maximumf %30, %31 : vector<32x128xf32>
    %c512 = arith.constant 512 : index
    %c0_18 = arith.constant 0 : index
    %33 = vector.load %arg2[%c512, %c0_18] : memref<640x128xbf16, #tpu.memory_space<vmem>>, vector<128x128xbf16>
    %34 = arith.truncf %32 : vector<32x128xf32> to vector<32x128xbf16>
    %cst_19 = arith.constant dense<0.000000e+00> : vector<32x128xf32>
    %35 = tpu.matmul %34, %33, %cst_19 {dimension_numbers = #tpu.dot_dimension_numbers<[1], [0], [0], [1], [0, 0, 1, 1], [], []>} : vector<32x128xbf16>, vector<128x128xbf16>, vector<32x128xf32> -> vector<32x128xf32>
    %c4 = arith.constant 4 : index
    %c0_20 = arith.constant 0 : index
    %36 = vector.load %arg3[%c4, %c0_20] : memref<8x128xf32, #tpu.memory_space<vmem>>, vector<1x128xf32>
    %37 = vector.broadcast %36 : vector<1x128xf32> to vector<32x128xf32>
    %38 = arith.addf %35, %37 : vector<32x128xf32>
    %39 = vector.extract_strided_slice %38 {offsets = [0, 0], sizes = [32, 8], strides = [1, 1]} : vector<32x128xf32> to vector<32x8xf32>
    %c0_21 = arith.constant 0 : index
    %c0_22 = arith.constant 0 : index
    %40 = vector.load %arg4[%c0_21, %c0_22] : memref<32x8xf32, #tpu.memory_space<vmem>>, vector<32x8xf32>
    tpu.vector_store %arg4[%c0_21, %c0_22], %39 {strides = array<i32>} : memref<32x8xf32, #tpu.memory_space<vmem>>, vector<32x8xf32>,
    return
  }
  func.func @transform_0(%arg0: i32) -> (i32, i32) {
    %c0_i32 = arith.constant 0 : i32
    %c0_i32_0 = arith.constant 0 : i32
    return %arg0, %c0_i32 : i32, i32
  }
  func.func @transform_1(%arg0: i32) -> (i32, i32) {
    %c0_i32 = arith.constant 0 : i32
    %c0_i32_0 = arith.constant 0 : i32
    %c0_i32_1 = arith.constant 0 : i32
    return %c0_i32, %c0_i32_0 : i32, i32
  }
  func.func @transform_2(%arg0: i32) -> (i32, i32) {
    %c0_i32 = arith.constant 0 : i32
    %c0_i32_0 = arith.constant 0 : i32
    %c0_i32_1 = arith.constant 0 : i32
    return %c0_i32, %c0_i32_0 : i32, i32
  }
  func.func @transform_3(%arg0: i32) -> (i32, i32) {
    %c0_i32 = arith.constant 0 : i32
    %c0_i32_0 = arith.constant 0 : i32
    return %arg0, %c0_i32 : i32, i32
  }
}

</mosaic_0001>

<llo_original>
// kernel: dueling_forward.1
$region0: #{dueling_forward.1}
  #allocation0 [shape = 'u32[]', space=smem, size = 0x4, offset = 0x4, fixed_abs, tag = 'smem constant byte address 0x4 - core index']
  #allocation1 [shape = 'u32[72,128]{1,0:T(1,128)}', space=vmem, size = 0x9000, scoped, tag = 'internal scratch']
  %s0 = inlined_call_operand.vmem [shape: f32[64,8], index: 0, kind: input, shape index: {}]
  %s1 = inlined_call_operand.hbm [shape: bf16[640,128], index: 1, kind: input, shape index: {}]
  %s2 = inlined_call_operand.vmem [shape: f32[8,128], index: 2, kind: input, shape index: {}]
  %s3 = inlined_call_operand.vmem [shape: f32[64,8], index: 3, kind: output, shape index: {}]
  %s4 = sld [smem:[#allocation0]]
  $region49: #{dueling_forward.1} parent=0
    _
  %s6 = ssub.s32 1, %s4
  %s7 = scalar_select 0, %s6, %s4
  $region1: #{dueling_forward.1} parent=0
    #allocation2 [shape = 'u8[163840]{0}', space=vmem, size = 0x28000, scoped, tag = 'input window, operand 1, single buffered']
    #allocation3 [shape = 's32[2]{0}', space=sflag, size = 0x8, scoped, tag = 'scoped memory for dueling_forward.1']
    %8 = vsyncpa [#allocation3], 0
    loop: start=0, step=1, limit=4
    $region2: #{dueling_forward.1} parent=1 // loop_pre_header
      _
    $region3: #{dueling_forward.1} parent=1 // loop_header
      %s10 = sphi 0, %s14
      %p11 = scmp.ge.s32.totalorder %s10, 4
      %s20 = sphi 0, %s22
      %s23 = sphi 0, %s20
      %s24 = sphi 0, %s23
      %s40 = sphi 0, %s24
      %s44 = sphi 0, %s44
      %s46 = sphi 0, %s44
      %s47 = sphi 0, %s46
      %s61 = sphi 0, %s47
      %s65 = sphi 0, %s65
      %s67 = sphi 0, %s65
      %s68 = sphi 0, %s67
      %s82 = sphi 0, %s68
      %s88 = sphi 0, %s90
      %s91 = sphi 0, %s88
      %s92 = sphi 0, %s91
      %s108 = sphi 0, %s92
    $region4: #{dueling_forward.1} parent=1 // loop_header_branch
      %13 = sbr.rel (%p11) target = $region8
    $region5: #{dueling_forward.1} parent=1 // loop_body
      %s15 = ssub.s32 %s10, 1
      %s16 = ssub.s32 %s10, 2
      %s17 = sadd.s32 %s10, 1
      %s18 = ssub.s32 %s10, %s17
      %p19 = scmp.eq.s32.totalorder %s18, 0
      %s21 = sadd.s32 %s20, 1
      %s22 = scalar_select %p19, %s20, %s21
      %p25 = pneg %p19
      %p26 = scmp.eq.s32.totalorder %s10, 1
      %p27 = por %p25, %p26
      %p28 = scmp.ne.s32.totalorder %s20, %s23
      %p29 = scmp.eq.s32.totalorder %s10, 0
      %p30 = por %p28, %p29
      %p31 = scmp.ne.s32.totalorder %s20, %s23
      %p32 = scmp.eq.s32.totalorder %s15, 1
      %p33 = por %p31, %p32
      %p34 = scmp.ne.s32.totalorder %s23, %s24
      %p35 = scmp.eq.s32.totalorder %s15, 0
      %p36 = por %p34, %p35
      %p37 = scmp.ne.s32.totalorder %s23, %s24
      %p38 = scmp.eq.s32.totalorder %s16, 1
      %p39 = por %p37, %p38
      %p41 = scmp.ne.s32.totalorder %s24, %s40
      %p42 = scmp.eq.s32.totalorder %s16, 0
      %p43 = por %p41, %p42
      %s45 = sadd.s32 %s44, 1
      %p48 = scmp.eq.s32.totalorder %s10, 1
      %p49 = scmp.ne.s32.totalorder %s44, %s46
      %p50 = scmp.eq.s32.totalorder %s10, 0
      %p51 = por %p49, %p50
      %p52 = scmp.ne.s32.totalorder %s44, %s46
      %p53 = scmp.eq.s32.totalorder %s15, 1
      %p54 = por %p52, %p53
      %p55 = scmp.ne.s32.totalorder %s46, %s47
      %p56 = scmp.eq.s32.totalorder %s15, 0
      %p57 = por %p55, %p56
      %p58 = scmp.ne.s32.totalorder %s46, %s47
      %p59 = scmp.eq.s32.totalorder %s16, 1
      %p60 = por %p58, %p59
      %p62 = scmp.ne.s32.totalorder %s47, %s61
      %p63 = scmp.eq.s32.totalorder %s16, 0
      %p64 = por %p62, %p63
      %s66 = sadd.s32 %s65, 1
      %p69 = scmp.eq.s32.totalorder %s10, 1
      %p70 = scmp.ne.s32.totalorder %s65, %s67
      %p71 = scmp.eq.s32.totalorder %s10, 0
      %p72 = por %p70, %p71
      %p73 = scmp.ne.s32.totalorder %s65, %s67
      %p74 = scmp.eq.s32.totalorder %s15, 1
      %p75 = por %p73, %p74
      %p76 = scmp.ne.s32.totalorder %s67, %s68
      %p77 = scmp.eq.s32.totalorder %s15, 0
      %p78 = por %p76, %p77
      %p79 = scmp.ne.s32.totalorder %s67, %s68
      %p80 = scmp.eq.s32.totalorder %s16, 1
      %p81 = por %p79, %p80
      %p83 = scmp.ne.s32.totalorder %s68, %s82
      %p84 = scmp.eq.s32.totalorder %s16, 0
      %p85 = por %p83, %p84
      %s86 = ssub.s32 %s10, %s17
      %p87 = scmp.eq.s32.totalorder %s86, 0
      %s89 = sadd.s32 %s88, 1
      %s90 = scalar_select %p87, %s88, %s89
      %p93 = pneg %p87
      %p94 = scmp.eq.s32.totalorder %s10, 1
      %p95 = por %p93, %p94
      %p96 = scmp.ne.s32.totalorder %s88, %s91
      %p97 = scmp.eq.s32.totalorder %s10, 0
      %p98 = por %p96, %p97
      %p99 = scmp.ne.s32.totalorder %s88, %s91
      %p100 = scmp.eq.s32.totalorder %s15, 1
      %p101 = por %p99, %p100
      %p102 = scmp.ne.s32.totalorder %s91, %s92
      %p103 = scmp.eq.s32.totalorder %s15, 0
      %p104 = por %p102, %p103
      %p105 = scmp.ne.s32.totalorder %s91, %s92
      %p106 = scmp.eq.s32.totalorder %s16, 1
      %p107 = por %p105, %p106
      %p109 = scmp.ne.s32.totalorder %s92, %s108
      %p110 = scmp.eq.s32.totalorder %s16, 0
      %p111 = por %p109, %p110
      %p112 = scmp.le.s32.totalorder 1, %s10
      %p113 = scmp.lt.s32.totalorder %s10, 3
      %p114 = pnand %p112, %p113
      %p115 = pneg %p114
      // Predicated region
      $region9: #{dueling_forward.1} parent=5 // pred_check
        _
      $region10: #{dueling_forward.1} parent=5 // pred_check_branch
        %117 = sbr.rel (%p114) target = $region12
      $region11: #{dueling_forward.1} parent=5 // pred_region
        %s118 = ssub.s32 %s10, 1
        // Predicated region
        $region13: #{dueling_forward.1} parent=11 // pred_check
          %p119 = pneg %p57
        $region14: #{dueling_forward.1} parent=11 // pred_check_branch
          %121 = sbr.rel (%p119) target = $region16
        $region15: #{dueling_forward.1} parent=11 // pred_region
          %123 = vsyncadd [#allocation3], 0
          %s124 = sshll.u32 %s1, 4
          %s125 = int_to_ptr.hbm [resolvable:$true] %s124
          %s126 = sshll.u32 [#allocation2], 4
          %s127 = int_to_ptr.vmem [resolvable:$true] %s126
          %132 = dma.hbm_to_vmem [thread:$0]  %s125, 5120, %s127, [#allocation3], 64, 64, 4
        $region16: #{dueling_forward.1} parent=11 // pred_fallthru
          _
        // Predicated region
        $region17: #{dueling_forward.1} parent=11 // pred_check
          %p133 = pneg %p78
        $region18: #{dueling_forward.1} parent=11 // pred_check_branch
          %135 = sbr.rel (%p133) target = $region20
        $region19: #{dueling_forward.1} parent=11 // pred_region
          _
        $region20: #{dueling_forward.1} parent=11 // pred_fallthru
          _
      $region12: #{dueling_forward.1} parent=5 // pred_fallthru
        _
      %p136 = scmp.lt.s32.totalorder %s10, 2
      // Predicated region
      $region21: #{dueling_forward.1} parent=5 // pred_check
        %p137 = pneg %p136
      $region22: #{dueling_forward.1} parent=5 // pred_check_branch
        %139 = sbr.rel (%p137) target = $region24
      $region23: #{dueling_forward.1} parent=5 // pred_region
        // Predicated region
        $region25: #{dueling_forward.1} parent=23 // pred_check
          %p140 = pneg %p30
        $region26: #{dueling_forward.1} parent=23 // pred_check_branch
          %142 = sbr.rel (%p140) target = $region28
        $region27: #{dueling_forward.1} parent=23 // pred_region
          %s143 = smul.u32 4, %s10
          %p144 = scmp.lt.s32.totalorder %s143, 7
          %s145 = scalar_select %p144, %s143, 7
          %s146 = smul.addr %s145, 8
          %s147 = scalar_lea.vmem %s0, %s146
          %s148 = smul.u32 4, %s10
        $region28: #{dueling_forward.1} parent=23 // pred_fallthru
          _
      $region24: #{dueling_forward.1} parent=5 // pred_fallthru
        _
      %p149 = scmp.le.s32.totalorder 1, %s10
      %p150 = scmp.lt.s32.totalorder %s10, 3
      %p151 = pnand %p149, %p150
      %p152 = pneg %p151
      // Predicated region
      $region29: #{dueling_forward.1} parent=5 // pred_check
        _
      $region30: #{dueling_forward.1} parent=5 // pred_check_branch
        %154 = sbr.rel (%p151) target = $region32
      $region31: #{dueling_forward.1} parent=5 // pred_region
        %s155 = ssub.s32 %s10, 1
        // Predicated region
        $region33: #{dueling_forward.1} parent=31 // pred_check
          %p156 = pneg %p57
        $region34: #{dueling_forward.1} parent=31 // pred_check_branch
          %158 = sbr.rel (%p156) target = $region36
        $region35: #{dueling_forward.1} parent=31 // pred_region
          %160 = dma.done [#allocation3], 5120
        $region36: #{dueling_forward.1} parent=31 // pred_fallthru
          _
        %s161 = smul.u32 4, %s15
        %p162 = scmp.lt.s32.totalorder %s161, 7
        %s163 = scalar_select %p162, %s161, 7
        %s164 = smul.addr %s163, 8
        %s165 = scalar_lea.vmem %s0, %s164
        %p166 = pneg %p36
        %p167 = pneg %p33
        %p168 = pneg %p57
        %p169 = pneg %p54
        %p170 = pneg %p78
        %p171 = pneg %p75
        %p172 = pneg %p104
        %p173 = pneg %p101
        %s174 = smul.u32 4, %s15
        %p175 = scmp.lt.s32.totalorder %s174, 7
        %s176 = scalar_select %p175, %s174, 7
        %s177 = smul.addr %s176, 8
        %s178 = scalar_lea.vmem %s3, %s177
        %s179 = smul.u32 4, %s15
        %p180 = scmp.lt.s32.totalorder %s179, 7
        %s181 = scalar_select %p180, %s179, 7
        %s182 = smul.addr %s181, 8
        %s183 = scalar_lea.vmem %s0, %s182
        %s184 = smul.u32 4, %s15
        %s185 = smul.u32 4, %s15
        %p186 = scmp.lt.s32.totalorder %s185, 7
        %s187 = scalar_select %p186, %s185, 7
        %s188 = smul.addr %s187, 8
        %s189 = scalar_lea.vmem %s3, %s188
        %s190 = smul.u32 4, %s15
        %v192 = vld [vmem:[%s183] sm:$0xff]
        %v193 = vld [vmem:[%s183 + $0x8] sm:$0xff]
        %v194 = vld [vmem:[%s183 + $0x10] sm:$0xff]
        %v195 = vld [vmem:[%s183 + $0x18] sm:$0xff]
        %v196 = vpack.c.bf16 %v193, %v192
        %v197 = vpack.c.bf16 %v195, %v194
        %v198 = vld [vmem:[#allocation2] sm:$0xf]
        %v199 = vld [vmem:[%s2] sm:$0x1]
        %v200 = vperm.slane %v199, 0
        %vm201 = vcmask 64512
        %v203 = vsel %vm201, %v196, 0
        %v206 = vsel %vm201, %v197, 0
        %vm208 = vcmask 1043456
        %v210 = vsel %vm208, %v198, 0
        %212 = vmatpush.bf16.msra.mxu0 0
        %213 = vmatpush.bf16.msra.mxu0 0
        %214 = vmatpush.bf16.msra.mxu0 0
        %215 = vmatpush.bf16.msra.mxu0 0
        %216 = vmatpush.bf16.msra.mxu0 0
        %217 = vmatpush.bf16.msra.mxu0 0
        %218 = vmatpush.bf16.msra.mxu0 0
        %219 = vmatpush.bf16.msra.mxu0 %v210
        %220 = vmatmul.bf16.gmra.mxu0 %v203
        %v221 = vpop.f32.mrf.mxu0
        %v222 = vadd.f32 %v200, %v221
        %v223 = vpop.f32.mrf.mxu0
        %v224 = vadd.f32 %v200, %v223
        %225 = vmatmul.bf16.gmra.mxu0 %v206
        %v226 = vpop.f32.mrf.mxu0
        %v227 = vadd.f32 %v200, %v226
        %v228 = vpop.f32.mrf.mxu0
        %v229 = vadd.f32 %v200, %v228
        %230 = vdwg.mxu0
        %v231 = vmax.f32 %v222, 0.0
        %v232 = vmax.f32 %v224, 0.0
        %v233 = vmax.f32 %v227, 0.0
        %v234 = vmax.f32 %v229, 0.0
        %v235 = vld [vmem:[#allocation2 + $0x40] sm:$0xf]
        %v236 = vld [vmem:[#allocation2 + $0x44] sm:$0xf]
        %v237 = vld [vmem:[#allocation2 + $0x48] sm:$0xf]
        %v238 = vld [vmem:[#allocation2 + $0x4c] sm:$0xf]
        %v239 = vld [vmem:[#allocation2 + $0x50] sm:$0xf]
        %v240 = vld [vmem:[#allocation2 + $0x54] sm:$0xf]
        %v241 = vld [vmem:[#allocation2 + $0x58] sm:$0xf]
        %v242 = vld [vmem:[#allocation2 + $0x5c] sm:$0xf]
        %v243 = vld [vmem:[#allocation2 + $0x60] sm:$0xf]
        %v244 = vld [vmem:[#allocation2 + $0x64] sm:$0xf]
        %v245 = vld [vmem:[#allocation2 + $0x68] sm:$0xf]
        %v246 = vld [vmem:[#allocation2 + $0x6c] sm:$0xf]
        %v247 = vld [vmem:[#allocation2 + $0x70] sm:$0xf]
        %v248 = vld [vmem:[#allocation2 + $0x74] sm:$0xf]
        %v249 = vld [vmem:[#allocation2 + $0x78] sm:$0xf]
        %v250 = vld [vmem:[#allocation2 + $0x7c] sm:$0xf]
        %v251 = vpack.c.bf16 %v232, %v231
        %v252 = vpack.c.bf16 %v234, %v233
        %v253 = vld [vmem:[%s2 + $0x1] sm:$0x1]
        %v254 = vperm.slane %v253, 0
        %v271 = vunpack.c.l.b16 %v235
        %v272 = vunpack.c.l.b16 %v236
        %v273 = vunpack.c.l.b16 %v237
        %v274 = vunpack.c.l.b16 %v238
        %v275 = vunpack.c.l.b16 %v239
        %v276 = vunpack.c.l.b16 %v240
        %v277 = vunpack.c.l.b16 %v241
        %v278 = vunpack.c.l.b16 %v242
        %v279 = vunpack.c.l.b16 %v243
        %v280 = vunpack.c.l.b16 %v244
        %v281 = vunpack.c.l.b16 %v245
        %v282 = vunpack.c.l.b16 %v246
        %v283 = vunpack.c.l.b16 %v247
        %v284 = vunpack.c.l.b16 %v248
        %v285 = vunpack.c.l.b16 %v249
        %v286 = vunpack.c.l.b16 %v250
        %v287 = vpack.c.b16 %v272, %v271
        %v288 = vpack.c.b16 %v274, %v273
        %v289 = vpack.c.b16 %v276, %v275
        %v290 = vpack.c.b16 %v278, %v277
        %v291 = vpack.c.b16 %v280, %v279
        %v292 = vpack.c.b16 %v282, %v281
        %v293 = vpack.c.b16 %v284, %v283
        %v294 = vpack.c.b16 %v286, %v285
        %303 = vmatpush.bf16.msra.mxu0 %v294
        %304 = vmatpush.bf16.msra.mxu0 %v293
        %305 = vmatpush.bf16.msra.mxu0 %v292
        %306 = vmatpush.bf16.msra.mxu0 %v291
        %307 = vmatpush.bf16.msra.mxu0 %v290
        %308 = vmatpush.bf16.msra.mxu0 %v289
        %309 = vmatpush.bf16.msra.mxu0 %v288
        %310 = vmatpush.bf16.msra.mxu0 %v287
        %311 = vmatmul.bf16.gmra.mxu0 %v251
        %v312 = vpop.f32.mrf.mxu0
        %v313 = vadd.f32 %v254, %v312
        %v314 = vpop.f32.mrf.mxu0
        %v315 = vadd.f32 %v254, %v314
        %316 = vmatmul.bf16.gmra.mxu0 %v252
        %v317 = vpop.f32.mrf.mxu0
        %v318 = vadd.f32 %v254, %v317
        %v319 = vpop.f32.mrf.mxu0
        %v320 = vadd.f32 %v254, %v319
        %321 = vdwg.mxu0
        %v322 = vmax.f32 %v313, 0.0
        %v323 = vmax.f32 %v315, 0.0
        %v324 = vmax.f32 %v318, 0.0
        %v325 = vmax.f32 %v320, 0.0
        %v326 = vld [vmem:[#allocation2 + $0x80] sm:$0xf]
        %v327 = vld [vmem:[#allocation2 + $0x84] sm:$0xf]
        %v328 = vld [vmem:[#allocation2 + $0x88] sm:$0xf]
        %v329 = vld [vmem:[#allocation2 + $0x8c] sm:$0xf]
        %v330 = vld [vmem:[#allocation2 + $0x90] sm:$0xf]
        %v331 = vld [vmem:[#allocation2 + $0x94] sm:$0xf]
        %v332 = vld [vmem:[#allocation2 + $0x98] sm:$0xf]
        %v333 = vld [vmem:[#allocation2 + $0x9c] sm:$0xf]
        %v334 = vld [vmem:[#allocation2 + $0xa0] sm:$0xf]
        %v335 = vld [vmem:[#allocation2 + $0xa4] sm:$0xf]
        %v336 = vld [vmem:[#allocation2 + $0xa8] sm:$0xf]
        %v337 = vld [vmem:[#allocation2 + $0xac] sm:$0xf]
        %v338 = vld [vmem:[#allocation2 + $0xb0] sm:$0xf]
        %v339 = vld [vmem:[#allocation2 + $0xb4] sm:$0xf]
        %v340 = vld [vmem:[#allocation2 + $0xb8] sm:$0xf]
        %v341 = vld [vmem:[#allocation2 + $0xbc] sm:$0xf]
        %v342 = vpack.c.bf16 %v323, %v322
        %v343 = vpack.c.bf16 %v325, %v324
        %v344 = vld [vmem:[%s2 + $0x2] sm:$0x1]
        %v345 = vperm.slane %v344, 0
        %v362 = vunpack.c.l.b16 %v326
        %v363 = vunpack.c.l.b16 %v327
        %v364 = vunpack.c.l.b16 %v328
        %v365 = vunpack.c.l.b16 %v329
        %v366 = vunpack.c.l.b16 %v330
        %v367 = vunpack.c.l.b16 %v331
        %v368 = vunpack.c.l.b16 %v332
        %v369 = vunpack.c.l.b16 %v333
        %v370 = vunpack.c.l.b16 %v334
        %v371 = vunpack.c.l.b16 %v335
        %v372 = vunpack.c.l.b16 %v336
        %v373 = vunpack.c.l.b16 %v337
        %v374 = vunpack.c.l.b16 %v338
        %v375 = vunpack.c.l.b16 %v339
        %v376 = vunpack.c.l.b16 %v340
        %v377 = vunpack.c.l.b16 %v341
        %v378 = vpack.c.b16 %v363, %v362
        %v379 = vpack.c.b16 %v365, %v364
        %v380 = vpack.c.b16 %v367, %v366
        %v381 = vpack.c.b16 %v369, %v368
        %v382 = vpack.c.b16 %v371, %v370
        %v383 = vpack.c.b16 %v373, %v372
        %v384 = vpack.c.b16 %v375, %v374
        %v385 = vpack.c.b16 %v377, %v376
        %394 = vmatpush.bf16.msra.mxu0 %v385
        %395 = vmatpush.bf16.msra.mxu0 %v384
        %396 = vmatpush.bf16.msra.mxu0 %v383
        %397 = vmatpush.bf16.msra.mxu0 %v382
        %398 = vmatpush.bf16.msra.mxu0 %v381
        %399 = vmatpush.bf16.msra.mxu0 %v380
        %400 = vmatpush.bf16.msra.mxu0 %v379
        %401 = vmatpush.bf16.msra.mxu0 %v378
        %402 = vmatmul.bf16.gmra.mxu0 %v342
        %v403 = vpop.f32.mrf.mxu0
        %v404 = vadd.f32 %v345, %v403
        %v405 = vpop.f32.mrf.mxu0
        %v406 = vadd.f32 %v345, %v405
        %407 = vmatmul.bf16.gmra.mxu0 %v343
        %v408 = vpop.f32.mrf.mxu0
        %v409 = vadd.f32 %v345, %v408
        %v410 = vpop.f32.mrf.mxu0
        %v411 = vadd.f32 %v345, %v410
        %412 = vdwg.mxu0
        %v413 = vmax.f32 %v404, 0.0
        %v414 = vmax.f32 %v406, 0.0
        %v415 = vmax.f32 %v409, 0.0
        %v416 = vmax.f32 %v411, 0.0
        %v417 = vld [vmem:[#allocation2 + $0xc0] sm:$0xf]
        %v418 = vld [vmem:[#allocation2 + $0xc4] sm:$0xf]
        %v419 = vld [vmem:[#allocation2 + $0xc8] sm:$0xf]
        %v420 = vld [vmem:[#allocation2 + $0xcc] sm:$0xf]
        %v421 = vld [vmem:[#allocation2 + $0xd0] sm:$0xf]
        %v422 = vld [vmem:[#allocation2 + $0xd4] sm:$0xf]
        %v423 = vld [vmem:[#allocation2 + $0xd8] sm:$0xf]
        %v424 = vld [vmem:[#allocation2 + $0xdc] sm:$0xf]
        %v425 = vld [vmem:[#allocation2 + $0xe0] sm:$0xf]
        %v426 = vld [vmem:[#allocation2 + $0xe4] sm:$0xf]
        %v427 = vld [vmem:[#allocation2 + $0xe8] sm:$0xf]
        %v428 = vld [vmem:[#allocation2 + $0xec] sm:$0xf]
        %v429 = vld [vmem:[#allocation2 + $0xf0] sm:$0xf]
        %v430 = vld [vmem:[#allocation2 + $0xf4] sm:$0xf]
        %v431 = vld [vmem:[#allocation2 + $0xf8] sm:$0xf]
        %v432 = vld [vmem:[#allocation2 + $0xfc] sm:$0xf]
        %v433 = vpack.c.bf16 %v414, %v413
        %v434 = vpack.c.bf16 %v416, %v415
        %v435 = vld [vmem:[%s2 + $0x3] sm:$0x1]
        %v436 = vperm.slane %v435, 0
        %v453 = vunpack.c.l.b16 %v417
        %v454 = vunpack.c.l.b16 %v418
        %v455 = vunpack.c.l.b16 %v419
        %v456 = vunpack.c.l.b16 %v420
        %v457 = vunpack.c.l.b16 %v421
        %v458 = vunpack.c.l.b16 %v422
        %v459 = vunpack.c.l.b16 %v423
        %v460 = vunpack.c.l.b16 %v424
        %v461 = vunpack.c.l.b16 %v425
        %v462 = vunpack.c.l.b16 %v426
        %v463 = vunpack.c.l.b16 %v427
        %v464 = vunpack.c.l.b16 %v428
        %v465 = vunpack.c.l.b16 %v429
        %v466 = vunpack.c.l.b16 %v430
        %v467 = vunpack.c.l.b16 %v431
        %v468 = vunpack.c.l.b16 %v432
        %v469 = vpack.c.b16 %v454, %v453
        %v470 = vpack.c.b16 %v456, %v455
        %v471 = vpack.c.b16 %v458, %v457
        %v472 = vpack.c.b16 %v460, %v459
        %v473 = vpack.c.b16 %v462, %v461
        %v474 = vpack.c.b16 %v464, %v463
        %v475 = vpack.c.b16 %v466, %v465
        %v476 = vpack.c.b16 %v468, %v467
        %485 = vmatpush.bf16.msra.mxu0 %v476
        %486 = vmatpush.bf16.msra.mxu0 %v475
        %487 = vmatpush.bf16.msra.mxu0 %v474
        %488 = vmatpush.bf16.msra.mxu0 %v473
        %489 = vmatpush.bf16.msra.mxu0 %v472
        %490 = vmatpush.bf16.msra.mxu0 %v471
        %491 = vmatpush.bf16.msra.mxu0 %v470
        %492 = vmatpush.bf16.msra.mxu0 %v469
        %493 = vmatmul.bf16.gmra.mxu0 %v433
        %v494 = vpop.f32.mrf.mxu0
        %v495 = vadd.f32 %v436, %v494
        %v496 = vpop.f32.mrf.mxu0
        %v497 = vadd.f32 %v436, %v496
        %498 = vmatmul.bf16.gmra.mxu0 %v434
        %v499 = vpop.f32.mrf.mxu0
        %v500 = vadd.f32 %v436, %v499
        %v501 = vpop.f32.mrf.mxu0
        %v502 = vadd.f32 %v436, %v501
        %503 = vdwg.mxu0
        %v504 = vmax.f32 %v495, 0.0
        %v505 = vmax.f32 %v497, 0.0
        %v506 = vmax.f32 %v500, 0.0
        %v507 = vmax.f32 %v502, 0.0
        %v508 = vld [vmem:[#allocation2 + $0x100] sm:$0xf]
        %v509 = vld [vmem:[#allocation2 + $0x104] sm:$0xf]
        %v510 = vld [vmem:[#allocation2 + $0x108] sm:$0xf]
        %v511 = vld [vmem:[#allocation2 + $0x10c] sm:$0xf]
        %v512 = vld [vmem:[#allocation2 + $0x110] sm:$0xf]
        %v513 = vld [vmem:[#allocation2 + $0x114] sm:$0xf]
        %v514 = vld [vmem:[#allocation2 + $0x118] sm:$0xf]
        %v515 = vld [vmem:[#allocation2 + $0x11c] sm:$0xf]
        %v516 = vld [vmem:[#allocation2 + $0x120] sm:$0xf]
        %v517 = vld [vmem:[#allocation2 + $0x124] sm:$0xf]
        %v518 = vld [vmem:[#allocation2 + $0x128] sm:$0xf]
        %v519 = vld [vmem:[#allocation2 + $0x12c] sm:$0xf]
        %v520 = vld [vmem:[#allocation2 + $0x130] sm:$0xf]
        %v521 = vld [vmem:[#allocation2 + $0x134] sm:$0xf]
        %v522 = vld [vmem:[#allocation2 + $0x138] sm:$0xf]
        %v523 = vld [vmem:[#allocation2 + $0x13c] sm:$0xf]
        %v524 = vpack.c.bf16 %v505, %v504
        %v525 = vpack.c.bf16 %v507, %v506
        %v526 = vld [vmem:[%s2 + $0x4] sm:$0x1]
        %v527 = vperm.slane %v526, 0
        %v544 = vunpack.c.l.b16 %v508
        %v545 = vunpack.c.l.b16 %v509
        %v546 = vunpack.c.l.b16 %v510
        %v547 = vunpack.c.l.b16 %v511
        %v548 = vunpack.c.l.b16 %v512
        %v549 = vunpack.c.l.b16 %v513
        %v550 = vunpack.c.l.b16 %v514
        %v551 = vunpack.c.l.b16 %v515
        %v552 = vunpack.c.l.b16 %v516
        %v553 = vunpack.c.l.b16 %v517
        %v554 = vunpack.c.l.b16 %v518
        %v555 = vunpack.c.l.b16 %v519
        %v556 = vunpack.c.l.b16 %v520
        %v557 = vunpack.c.l.b16 %v521
        %v558 = vunpack.c.l.b16 %v522
        %v559 = vunpack.c.l.b16 %v523
        %v560 = vpack.c.b16 %v545, %v544
        %v561 = vpack.c.b16 %v547, %v546
        %v562 = vpack.c.b16 %v549, %v548
        %v563 = vpack.c.b16 %v551, %v550
        %v564 = vpack.c.b16 %v553, %v552
        %v565 = vpack.c.b16 %v555, %v554
        %v566 = vpack.c.b16 %v557, %v556
        %v567 = vpack.c.b16 %v559, %v558
        %576 = vmatpush.bf16.msra.mxu0 %v567
        %577 = vmatpush.bf16.msra.mxu0 %v566
        %578 = vmatpush.bf16.msra.mxu0 %v565
        %579 = vmatpush.bf16.msra.mxu0 %v564
        %580 = vmatpush.bf16.msra.mxu0 %v563
        %581 = vmatpush.bf16.msra.mxu0 %v562
        %582 = vmatpush.bf16.msra.mxu0 %v561
        %583 = vmatpush.bf16.msra.mxu0 %v560
        %584 = vmatmul.bf16.gmra.mxu0 %v524
        %v585 = vpop.f32.mrf.mxu0
        %v586 = vadd.f32 %v527, %v585
        %v587 = vpop.f32.mrf.mxu0
        %v588 = vadd.f32 %v527, %v587
        %589 = vmatmul.bf16.gmra.mxu0 %v525
        %v590 = vpop.f32.mrf.mxu0
        %v591 = vadd.f32 %v527, %v590
        %v592 = vpop.f32.mrf.mxu0
        %v593 = vadd.f32 %v527, %v592
        %594 = vdwg.mxu0
        %595 = vst.msk [vmem:[%s189] sm:$0xff] %vm201, %v586
        %596 = vst.msk [vmem:[%s189 + $0x8] sm:$0xff] %vm201, %v588
        %597 = vst.msk [vmem:[%s189 + $0x10] sm:$0xff] %vm201, %v591
        %598 = vst.msk [vmem:[%s189 + $0x18] sm:$0xff] %vm201, %v593
        %s599 = smul.u32 4, %s15
        %p600 = scmp.lt.s32.totalorder %s599, 7
        %s601 = scalar_select %p600, %s599, 7
        %s602 = smul.addr %s601, 8
        %s603 = scalar_lea.vmem %s3, %s602
        // Predicated region
        $region37: #{dueling_forward.1} parent=31 // pred_check
          %p604 = pneg %p101
        $region38: #{dueling_forward.1} parent=31 // pred_check_branch
          %606 = sbr.rel (%p604) target = $region40
        $region39: #{dueling_forward.1} parent=31 // pred_region
          %s607 = smul.u32 4, %s15
        $region40: #{dueling_forward.1} parent=31 // pred_fallthru
          _
      $region32: #{dueling_forward.1} parent=5 // pred_fallthru
        _
      %p608 = scmp.le.s32.totalorder 2, %s10
      // Predicated region
      $region41: #{dueling_forward.1} parent=5 // pred_check
        %p609 = pneg %p608
      $region42: #{dueling_forward.1} parent=5 // pred_check_branch
        %611 = sbr.rel (%p609) target = $region44
      $region43: #{dueling_forward.1} parent=5 // pred_region
        %s612 = ssub.s32 %s10, 2
        // Predicated region
        $region45: #{dueling_forward.1} parent=43 // pred_check
          %p613 = pneg %p107
        $region46: #{dueling_forward.1} parent=43 // pred_check_branch
          %615 = sbr.rel (%p613) target = $region48
        $region47: #{dueling_forward.1} parent=43 // pred_region
          %s616 = smul.u32 4, %s16
          %p617 = scmp.lt.s32.totalorder %s616, 7
          %s618 = scalar_select %p617, %s616, 7
          %s619 = smul.addr %s618, 8
          %s620 = scalar_lea.vmem %s3, %s619
        $region48: #{dueling_forward.1} parent=43 // pred_fallthru
          _
      $region44: #{dueling_forward.1} parent=5 // pred_fallthru
        _
    $region6: #{dueling_forward.1} parent=1 // loop_footer
      %s14 = sadd.s32 1, %s10
    $region7: #{dueling_forward.1} parent=1 // loop_footer_branch
      %9 = sbr.rel target = $region3
    $region8: #{dueling_forward.1} parent=1 // loop_exit
      _
    %621 = vsyncpa [#allocation3], 1
    %s622 = scalar_lea.sflag [#allocation3], 1
    %623 = vsyncpa %s622, 1

</llo_original>
